<compile_context>
chip_gen: v5e
topology: v5e:2x2
jax: 0.10.0
libtpu: 0.0.40
codegen_flags: <defaults>
</compile_context>

<pallas_src>
import jax
import jax.numpy as jnp
from jax.experimental import pallas as pl
from jax.experimental.pallas import tpu as pltpu


def _round_up(x, m):
    return ((x + m - 1) // m) * m


def _bmm_kernel(x_ref, w_ref, o_ref, acc_ref):
    # x_ref: (pt, tm, tk), w_ref: (pt, tk, tn), o_ref/acc_ref: (pt, tm, tn)
    k = pl.program_id(3)

    @pl.when(k == 0)
    def _():
        acc_ref[...] = jnp.zeros_like(acc_ref)

    acc_ref[...] += jnp.einsum(
        "pmk,pkn->pmn", x_ref[...], w_ref[...],
        preferred_element_type=jnp.float32)

    @pl.when(k == pl.num_programs(3) - 1)
    def _():
        o_ref[...] = acc_ref[...].astype(o_ref.dtype)


def batch_projection_forward(x, weight, *,
                             tm=256, tn=256, tk=512,
                             max_proj_per_step=8,
                             compute_dtype=jnp.bfloat16,
                             vmem_limit_bytes=48 * 1024 * 1024):
    """x: (P, M, K), weight: (P, K, N) -> (P, M, N) in x.dtype.

    Matmul runs on the MXU in `compute_dtype` with f32 accumulation.
    """
    P, M, K = x.shape
    Pw, Kw, N = weight.shape
    assert P == Pw and K == Kw
    out_dtype = x.dtype

    # Effective tiles: clamp requested tiles to the (hardware-aligned) padded
    # problem size. Last-two block dims stay multiples of (8, 128).
    tm_e = min(tm, _round_up(M, 8))
    tn_e = min(tn, _round_up(N, 128))
    tk_e = min(tk, _round_up(K, 128))
    M_p = _round_up(M, tm_e)
    N_p = _round_up(N, tn_e)
    K_p = _round_up(K, tk_e)

    # Fold several projections into one grid step when a single projection is a
    # single tile (amortizes per-step overhead at small per-projection sizes).
    if M_p == tm_e and N_p == tn_e and K_p == tk_e:
        pt = next(c for c in range(min(P, max_proj_per_step), 0, -1) if P % c == 0)
    else:
        pt = 1

    # Cast (after any f32 init/normalize done by the caller) and zero-pad.
    xc = x.astype(compute_dtype)
    wc = weight.astype(compute_dtype)
    if (M_p, K_p) != (M, K):
        xc = jnp.pad(xc, ((0, 0), (0, M_p - M), (0, K_p - K)))
    if (K_p, N_p) != (K, N):
        wc = jnp.pad(wc, ((0, 0), (0, K_p - K), (0, N_p - N)))

    grid = (P // pt, M_p // tm_e, N_p // tn_e, K_p // tk_e)
    itemsize = jnp.dtype(compute_dtype).itemsize

    out = pl.pallas_call(
        _bmm_kernel,
        out_shape=jax.ShapeDtypeStruct((P, M_p, N_p), out_dtype),
        grid=grid,
        in_specs=[
            pl.BlockSpec((pt, tm_e, tk_e), lambda p, i, j, k: (p, i, k)),
            pl.BlockSpec((pt, tk_e, tn_e), lambda p, i, j, k: (p, k, j)),
        ],
        out_specs=pl.BlockSpec((pt, tm_e, tn_e), lambda p, i, j, k: (p, i, j)),
        scratch_shapes=[pltpu.VMEM((pt, tm_e, tn_e), jnp.float32)],
        compiler_params=pltpu.CompilerParams(
            dimension_semantics=("parallel", "parallel", "parallel", "arbitrary"),
            vmem_limit_bytes=vmem_limit_bytes,
        ),
        cost_estimate=pl.CostEstimate(
            flops=2 * P * M_p * N_p * K_p,
            transcendentals=0,
            bytes_accessed=(P * M_p * K_p * itemsize
                            + P * K_p * N_p * itemsize
                            + P * M_p * N_p * jnp.dtype(out_dtype).itemsize),
        ),
    )(xc, wc)

    if (M_p, N_p) != (M, N):
        out = out[:, :M, :N]
    return out


def init_batch_projection_weight(key, num_projections, in_features, out_features,
                                 dtype=jnp.float32):
    """Matches reset_parameters(): N(0,1) then F.normalize along dim=1 (in f32)."""
    w = jax.random.normal(key, (num_projections, in_features, out_features), dtype)
    norm = jnp.sqrt(jnp.sum(w * w, axis=1, keepdims=True))
    w = w / jnp.maximum(norm, 1e-12)  # F.normalize default eps=1e-12
    return w


if __name__ == "__main__":
    key = jax.random.PRNGKey(0)
    k_w, k_x, k_w2, k_x2 = jax.random.split(key, 4)

    # ---- Test 1: module-default small shapes, bf16 compute (perf path) ----
    num_projections = 2     # P
    seq = 16                # M
    in_features = 32        # K
    out_features = 128      # N

    weight = init_batch_projection_weight(
        k_w, num_projections, in_features, out_features)
    x = jax.random.normal(
        k_x, (num_projections, seq, in_features), jnp.float32)

    out = batch_projection_forward(x, weight)          # bf16 operands, f32 acc
    out = jax.block_until_ready(out)

    ref = jnp.einsum("pmk,pkn->pmn", x, weight)        # f32 reference
    assert out.shape == (num_projections, seq, out_features)
    assert jnp.allclose(out, ref, atol=2e-2, rtol=2e-2), (
        float(jnp.max(jnp.abs(out - ref))))

    # ---- Test 2: odd shapes + small tiles, f32 compute (exercises M/N/K tiling,
    #      K-accumulation across grid steps, padding + output slicing) ----
    P2, M2, K2, N2 = 3, 24, 200, 300
    w2 = init_batch_projection_weight(k_w2, P2, K2, N2)
    x2 = jax.random.normal(k_x2, (P2, M2, K2), jnp.float32)

    out2 = batch_projection_forward(
        x2, w2, tm=16, tn=128, tk=128, compute_dtype=jnp.float32)
    out2 = jax.block_until_ready(out2)

    ref2 = jnp.einsum("pmk,pkn->pmn", x2, w2)
    assert out2.shape == (P2, M2, N2)
    assert jnp.allclose(out2, ref2, atol=1e-4, rtol=1e-4), (
        float(jnp.max(jnp.abs(out2 - ref2))))

    # TODO(synk): `.as_subclass(vsa_tensor)` is a torch tensor-subclass tag
    # (MAP/HRR/VTB VSA wrapper) with no JAX equivalent; numerics are identical.
    print("KERNEL_OK")
</pallas_src>

<mosaic_0001>
module attributes {stable_mosaic.version = 11 : i64} {
  func.func @_bmm_kernel(%arg0: i32, %arg1: i32, %arg2: i32, %arg3: i32, %arg4: memref<2x16x128xbf16, #tpu.memory_space<vmem>>, %arg5: memref<2x128x128xbf16, #tpu.memory_space<vmem>>, %arg6: memref<2x16x128xf32, #tpu.memory_space<vmem>>, %arg7: memref<2x16x128xf32, #tpu.memory_space<vmem>>) attributes {dimension_semantics = [#tpu.dimension_semantics<parallel>, #tpu.dimension_semantics<parallel>, #tpu.dimension_semantics<parallel>, #tpu.dimension_semantics<arbitrary>], iteration_bounds = array<i64: 1, 1, 1, 1>, scalar_prefetch = 0 : i64, scratch_operands = 1 : i64, tpu.core_type = #tpu.core_type<tc>, window_params = [{transform_indices = @transform_0, window_bounds = array<i64: 2, 16, 128>}, {transform_indices = @transform_1, window_bounds = array<i64: 2, 128, 128>}, {transform_indices = @transform_2, window_bounds = array<i64: 2, 16, 128>}]} {
    %c0_i32 = arith.constant 0 : i32
    %0 = arith.cmpi eq, %arg3, %c0_i32 : i32
    %1 = arith.extui %0 : i1 to i32
    %c0_i32_0 = arith.constant 0 : i32
    %2 = arith.cmpi ne, %1, %c0_i32_0 : i32
    scf.if %2 {
      %cst_14 = arith.constant 0.000000e+00 : f32
      %12 = vector.broadcast %cst_14 : f32 to vector<2x16x128xf32>
      %c0_15 = arith.constant 0 : index
      %c0_16 = arith.constant 0 : index
      %c0_17 = arith.constant 0 : index
      %13 = vector.load %arg7[%c0_15, %c0_16, %c0_17] : memref<2x16x128xf32, #tpu.memory_space<vmem>>, vector<2x16x128xf32>
      tpu.vector_store %arg7[%c0_15, %c0_16, %c0_17], %12 {strides = array<i32>} : memref<2x16x128xf32, #tpu.memory_space<vmem>>, vector<2x16x128xf32>,
    } else {
    }
    %c0 = arith.constant 0 : index
    %c0_1 = arith.constant 0 : index
    %c0_2 = arith.constant 0 : index
    %3 = vector.load %arg7[%c0, %c0_1, %c0_2] : memref<2x16x128xf32, #tpu.memory_space<vmem>>, vector<2x16x128xf32>
    %c0_3 = arith.constant 0 : index
    %c0_4 = arith.constant 0 : index
    %c0_5 = arith.constant 0 : index
    %4 = vector.load %arg4[%c0_3, %c0_4, %c0_5] : memref<2x16x128xbf16, #tpu.memory_space<vmem>>, vector<2x16x128xbf16>
    %c0_6 = arith.constant 0 : index
    %c0_7 = arith.constant 0 : index
    %c0_8 = arith.constant 0 : index
    %5 = vector.load %arg5[%c0_6, %c0_7, %c0_8] : memref<2x128x128xbf16, #tpu.memory_space<vmem>>, vector<2x128x128xbf16>
    "tpu.trace_start"() <{level = 10 : i32, message = "pmk,pkn->pmn"}> : () -> ()
    %cst = arith.constant dense<0.000000e+00> : vector<2x16x128xf32>
    %6 = tpu.matmul %4, %5, %cst {dimension_numbers = #tpu.dot_dimension_numbers<[2], [1], [1], [2], [0, 0, 0, 1, 1, 2], [0], [0]>} : vector<2x16x128xbf16>, vector<2x128x128xbf16>, vector<2x16x128xf32> -> vector<2x16x128xf32>
    "tpu.trace_stop"() : () -> ()
    %7 = arith.addf %3, %6 : vector<2x16x128xf32>
    %c0_9 = arith.constant 0 : index
    %c0_10 = arith.constant 0 : index
    %c0_11 = arith.constant 0 : index
    %8 = vector.load %arg7[%c0_9, %c0_10, %c0_11] : memref<2x16x128xf32, #tpu.memory_space<vmem>>, vector<2x16x128xf32>
    tpu.vector_store %arg7[%c0_9, %c0_10, %c0_11], %7 {strides = array<i32>} : memref<2x16x128xf32, #tpu.memory_space<vmem>>, vector<2x16x128xf32>,
    %c0_i32_12 = arith.constant 0 : i32
    %9 = arith.cmpi eq, %arg3, %c0_i32_12 : i32
    %10 = arith.extui %9 : i1 to i32
    %c0_i32_13 = arith.constant 0 : i32
    %11 = arith.cmpi ne, %10, %c0_i32_13 : i32
    scf.if %11 {
      %c0_14 = arith.constant 0 : index
      %c0_15 = arith.constant 0 : index
      %c0_16 = arith.constant 0 : index
      %12 = vector.load %arg7[%c0_14, %c0_15, %c0_16] : memref<2x16x128xf32, #tpu.memory_space<vmem>>, vector<2x16x128xf32>
      %c0_17 = arith.constant 0 : index
      %c0_18 = arith.constant 0 : index
      %c0_19 = arith.constant 0 : index
      %13 = vector.load %arg6[%c0_17, %c0_18, %c0_19] : memref<2x16x128xf32, #tpu.memory_space<vmem>>, vector<2x16x128xf32>
      tpu.vector_store %arg6[%c0_17, %c0_18, %c0_19], %12 {strides = array<i32>} : memref<2x16x128xf32, #tpu.memory_space<vmem>>, vector<2x16x128xf32>,
    } else {
    }
    return
  }
  func.func @transform_0(%arg0: i32, %arg1: i32, %arg2: i32, %arg3: i32) -> (i32, i32, i32) {
    %c0_i32 = arith.constant 0 : i32
    return %arg0, %arg1, %arg3 : i32, i32, i32
  }
  func.func @transform_1(%arg0: i32, %arg1: i32, %arg2: i32, %arg3: i32) -> (i32, i32, i32) {
    %c0_i32 = arith.constant 0 : i32
    return %arg0, %arg3, %arg2 : i32, i32, i32
  }
  func.func @transform_2(%arg0: i32, %arg1: i32, %arg2: i32, %arg3: i32) -> (i32, i32, i32) {
    %c0_i32 = arith.constant 0 : i32
    return %arg0, %arg1, %arg2 : i32, i32, i32
  }
}

</mosaic_0001>

<llo_original>
// kernel: tpu_custom_call.1
$region0: #{tpu_custom_call.1}
  #allocation0 [shape = 'u32[]', space=smem, size = 0x4, offset = 0x4, fixed_abs, tag = 'smem constant byte address 0x4 - core index']
  #allocation1 [shape = 'u32[72,128]{1,0:T(1,128)}', space=vmem, size = 0x9000, scoped, tag = 'internal scratch']
  #allocation2 [shape = 'f32[2,16,128]{2,1,0:T(8,128)}', space=vmem, size = 0x4000, scoped, tag = 'scratch operand']
  %s0 = inlined_call_operand.hbm [shape: bf16[2,16,128], index: 0, kind: input, shape index: {}]
  %s1 = inlined_call_operand.hbm [shape: bf16[2,128,128], index: 1, kind: input, shape index: {}]
  %s2 = inlined_call_operand.hbm [shape: f32[2,16,128], index: 2, kind: output, shape index: {}]
  %s3 = sld [smem:[#allocation0]]
  $region34: #{tpu_custom_call.1} parent=0
    _
  %s5 = ssub.s32 1, %s3
  %s6 = scalar_select 0, %s5, %s3
  $region1: #{tpu_custom_call.1} parent=0
    #allocation3 [shape = 'u8[8192]{0}', space=vmem, size = 0x2000, scoped, tag = 'input window, operand 0, single buffered']
    #allocation4 [shape = 's32[1]{0}', space=sflag, size = 0x4, scoped, tag = 'scoped memory for tpu_custom_call.1']
    #allocation5 [shape = 's32[1]{0}', space=sflag, size = 0x4, scoped, tag = 'scoped memory for tpu_custom_call.1']
    #allocation6 [shape = 'u8[65536]{0}', space=vmem, size = 0x10000, scoped, tag = 'input window, operand 1, single buffered']
    #allocation7 [shape = 's32[1]{0}', space=sflag, size = 0x4, scoped, tag = 'scoped memory for tpu_custom_call.1']
    #allocation8 [shape = 'u8[16384]{0}', space=vmem, size = 0x4000, scoped, tag = 'output window, operand 0, single buffered']
    %7 = vsyncpa [#allocation4], 0
    %8 = vsyncpa [#allocation7], 0
    %9 = vsyncpa [#allocation5], 0
    // Predicated region
    $region2: #{tpu_custom_call.1} parent=1 // pred_check
      _
    $region3: #{tpu_custom_call.1} parent=1 // pred_check_branch
      %11 = sbr.rel (0) target = $region5
    $region4: #{tpu_custom_call.1} parent=1 // pred_region
      %13 = vsyncadd [#allocation4], 0
      %s14 = sshll.u32 %s0, 4
      %s15 = int_to_ptr.hbm [resolvable:$true] %s14
      %s16 = sshll.u32 [#allocation3], 4
      %s17 = int_to_ptr.vmem [resolvable:$true] %s16
      %22 = dma.hbm_to_vmem [thread:$0]  %s15, 256, %s17, [#allocation4], 64, 64, 4
    $region5: #{tpu_custom_call.1} parent=1 // pred_fallthru
      _
    // Predicated region
    $region6: #{tpu_custom_call.1} parent=1 // pred_check
      _
    $region7: #{tpu_custom_call.1} parent=1 // pred_check_branch
      %24 = sbr.rel (0) target = $region9
    $region8: #{tpu_custom_call.1} parent=1 // pred_region
      %26 = vsyncadd [#allocation7], 0
      %s27 = sshll.u32 %s1, 4
      %s28 = int_to_ptr.hbm [resolvable:$true] %s27
      %s29 = sshll.u32 [#allocation6], 4
      %s30 = int_to_ptr.vmem [resolvable:$true] %s29
      %35 = dma.hbm_to_vmem [thread:$0]  %s28, 2048, %s30, [#allocation7], 64, 64, 4
    $region9: #{tpu_custom_call.1} parent=1 // pred_fallthru
      _
    // Predicated region
    $region10: #{tpu_custom_call.1} parent=1 // pred_check
      _
    $region11: #{tpu_custom_call.1} parent=1 // pred_check_branch
      %37 = sbr.rel (0) target = $region13
    $region12: #{tpu_custom_call.1} parent=1 // pred_region
      %39 = dma.done [#allocation4], 256
    $region13: #{tpu_custom_call.1} parent=1 // pred_fallthru
      _
    // Predicated region
    $region14: #{tpu_custom_call.1} parent=1 // pred_check
      _
    $region15: #{tpu_custom_call.1} parent=1 // pred_check_branch
      %41 = sbr.rel (0) target = $region17
    $region16: #{tpu_custom_call.1} parent=1 // pred_region
      %43 = dma.done [#allocation7], 2048
    $region17: #{tpu_custom_call.1} parent=1 // pred_fallthru
      _
    %p44 = scmp.eq.s32.totalorder 0, 0
    // Predicated region
    $region18: #{tpu_custom_call.1} parent=1 // pred_check
      %p45 = pneg %p44
    $region19: #{tpu_custom_call.1} parent=1 // pred_check_branch
      %47 = sbr.rel (%p45) target = $region21
    $region20: #{tpu_custom_call.1} parent=1 // pred_region
      %48 = vst [vmem:[#allocation2] sm:$0xff] 0.0
      %49 = vst [vmem:[#allocation2 + $0x8] sm:$0xff] 0.0
      %50 = vst [vmem:[#allocation2 + $0x10] sm:$0xff] 0.0
      %51 = vst [vmem:[#allocation2 + $0x18] sm:$0xff] 0.0
    $region21: #{tpu_custom_call.1} parent=1 // pred_fallthru
      _
    %v52 = vld [vmem:[#allocation2] sm:$0xff]
    %v53 = vld [vmem:[#allocation2 + $0x8] sm:$0xff]
    %v54 = vld [vmem:[#allocation2 + $0x10] sm:$0xff]
    %v55 = vld [vmem:[#allocation2 + $0x18] sm:$0xff]
    %v56 = vld [vmem:[#allocation3] sm:$0xf]
    %v57 = vld [vmem:[#allocation3 + $0x4] sm:$0xf]
    %v58 = vld [vmem:[#allocation3 + $0x8] sm:$0xf]
    %v59 = vld [vmem:[#allocation3 + $0xc] sm:$0xf]
    %v60 = vld [vmem:[#allocation6] sm:$0xf]
    %v61 = vld [vmem:[#allocation6 + $0x4] sm:$0xf]
    %v62 = vld [vmem:[#allocation6 + $0x8] sm:$0xf]
    %v63 = vld [vmem:[#allocation6 + $0xc] sm:$0xf]
    %v64 = vld [vmem:[#allocation6 + $0x10] sm:$0xf]
    %v65 = vld [vmem:[#allocation6 + $0x14] sm:$0xf]
    %v66 = vld [vmem:[#allocation6 + $0x18] sm:$0xf]
    %v67 = vld [vmem:[#allocation6 + $0x1c] sm:$0xf]
    %v68 = vld [vmem:[#allocation6 + $0x20] sm:$0xf]
    %v69 = vld [vmem:[#allocation6 + $0x24] sm:$0xf]
    %v70 = vld [vmem:[#allocation6 + $0x28] sm:$0xf]
    %v71 = vld [vmem:[#allocation6 + $0x2c] sm:$0xf]
    %v72 = vld [vmem:[#allocation6 + $0x30] sm:$0xf]
    %v73 = vld [vmem:[#allocation6 + $0x34] sm:$0xf]
    %v74 = vld [vmem:[#allocation6 + $0x38] sm:$0xf]
    %v75 = vld [vmem:[#allocation6 + $0x3c] sm:$0xf]
    %v76 = vld [vmem:[#allocation6 + $0x40] sm:$0xf]
    %v77 = vld [vmem:[#allocation6 + $0x44] sm:$0xf]
    %v78 = vld [vmem:[#allocation6 + $0x48] sm:$0xf]
    %v79 = vld [vmem:[#allocation6 + $0x4c] sm:$0xf]
    %v80 = vld [vmem:[#allocation6 + $0x50] sm:$0xf]
    %v81 = vld [vmem:[#allocation6 + $0x54] sm:$0xf]
    %v82 = vld [vmem:[#allocation6 + $0x58] sm:$0xf]
    %v83 = vld [vmem:[#allocation6 + $0x5c] sm:$0xf]
    %v84 = vld [vmem:[#allocation6 + $0x60] sm:$0xf]
    %v85 = vld [vmem:[#allocation6 + $0x64] sm:$0xf]
    %v86 = vld [vmem:[#allocation6 + $0x68] sm:$0xf]
    %v87 = vld [vmem:[#allocation6 + $0x6c] sm:$0xf]
    %v88 = vld [vmem:[#allocation6 + $0x70] sm:$0xf]
    %v89 = vld [vmem:[#allocation6 + $0x74] sm:$0xf]
    %v90 = vld [vmem:[#allocation6 + $0x78] sm:$0xf]
    %v91 = vld [vmem:[#allocation6 + $0x7c] sm:$0xf]
    %v94 = vunpack.c.l.b16 %v56
    %v95 = vunpack.c.l.b16 %v57
    %v96 = vpack.c.b16 %v95, %v94
    %v114 = vunpack.c.l.b16 %v60
    %v115 = vunpack.c.l.b16 %v61
    %v116 = vunpack.c.l.b16 %v62
    %v117 = vunpack.c.l.b16 %v63
    %v118 = vunpack.c.l.b16 %v64
    %v119 = vunpack.c.l.b16 %v65
    %v120 = vunpack.c.l.b16 %v66
    %v121 = vunpack.c.l.b16 %v67
    %v122 = vunpack.c.l.b16 %v68
    %v123 = vunpack.c.l.b16 %v69
    %v124 = vunpack.c.l.b16 %v70
    %v125 = vunpack.c.l.b16 %v71
    %v126 = vunpack.c.l.b16 %v72
    %v127 = vunpack.c.l.b16 %v73
    %v128 = vunpack.c.l.b16 %v74
    %v129 = vunpack.c.l.b16 %v75
    %v130 = vpack.c.b16 %v115, %v114
    %v131 = vpack.c.b16 %v117, %v116
    %v132 = vpack.c.b16 %v119, %v118
    %v133 = vpack.c.b16 %v121, %v120
    %v134 = vpack.c.b16 %v123, %v122
    %v135 = vpack.c.b16 %v125, %v124
    %v136 = vpack.c.b16 %v127, %v126
    %v137 = vpack.c.b16 %v129, %v128
    %146 = vmatpush.bf16.msra.mxu0 %v137
    %147 = vmatpush.bf16.msra.mxu0 %v136
    %148 = vmatpush.bf16.msra.mxu0 %v135
    %149 = vmatpush.bf16.msra.mxu0 %v134
    %150 = vmatpush.bf16.msra.mxu0 %v133
    %151 = vmatpush.bf16.msra.mxu0 %v132
    %152 = vmatpush.bf16.msra.mxu0 %v131
    %153 = vmatpush.bf16.msra.mxu0 %v130
    %154 = vmatmul.bf16.gmra.mxu0 %v96
    %v155 = vpop.f32.mrf.mxu0
    %v156 = vadd.f32 0.0, %v155
    %v157 = vpop.f32.mrf.mxu0
    %v158 = vadd.f32 0.0, %v157
    %159 = vdwg.mxu0
    %v162 = vunpack.c.l.b16 %v58
    %v163 = vunpack.c.l.b16 %v59
    %v164 = vpack.c.b16 %v163, %v162
    %v182 = vunpack.c.l.b16 %v76
    %v183 = vunpack.c.l.b16 %v77
    %v184 = vunpack.c.l.b16 %v78
    %v185 = vunpack.c.l.b16 %v79
    %v186 = vunpack.c.l.b16 %v80
    %v187 = vunpack.c.l.b16 %v81
    %v188 = vunpack.c.l.b16 %v82
    %v189 = vunpack.c.l.b16 %v83
    %v190 = vunpack.c.l.b16 %v84
    %v191 = vunpack.c.l.b16 %v85
    %v192 = vunpack.c.l.b16 %v86
    %v193 = vunpack.c.l.b16 %v87
    %v194 = vunpack.c.l.b16 %v88
    %v195 = vunpack.c.l.b16 %v89
    %v196 = vunpack.c.l.b16 %v90
    %v197 = vunpack.c.l.b16 %v91
    %v198 = vpack.c.b16 %v183, %v182
    %v199 = vpack.c.b16 %v185, %v184
    %v200 = vpack.c.b16 %v187, %v186
    %v201 = vpack.c.b16 %v189, %v188
    %v202 = vpack.c.b16 %v191, %v190
    %v203 = vpack.c.b16 %v193, %v192
    %v204 = vpack.c.b16 %v195, %v194
    %v205 = vpack.c.b16 %v197, %v196
    %214 = vmatpush.bf16.msra.mxu0 %v205
    %215 = vmatpush.bf16.msra.mxu0 %v204
    %216 = vmatpush.bf16.msra.mxu0 %v203
    %217 = vmatpush.bf16.msra.mxu0 %v202
    %218 = vmatpush.bf16.msra.mxu0 %v201
    %219 = vmatpush.bf16.msra.mxu0 %v200
    %220 = vmatpush.bf16.msra.mxu0 %v199
    %221 = vmatpush.bf16.msra.mxu0 %v198
    %222 = vmatmul.bf16.gmra.mxu0 %v164
    %v223 = vpop.f32.mrf.mxu0
    %v224 = vadd.f32 0.0, %v223
    %v225 = vpop.f32.mrf.mxu0
    %v226 = vadd.f32 0.0, %v225
    %227 = vdwg.mxu0
    %v228 = vadd.f32 %v52, %v156
    %v229 = vadd.f32 %v53, %v158
    %v230 = vadd.f32 %v54, %v224
    %v231 = vadd.f32 %v55, %v226
    %232 = vst [vmem:[#allocation2] sm:$0xff] %v228
    %233 = vst [vmem:[#allocation2 + $0x8] sm:$0xff] %v229
    %234 = vst [vmem:[#allocation2 + $0x10] sm:$0xff] %v230
    %235 = vst [vmem:[#allocation2 + $0x18] sm:$0xff] %v231
    // Predicated region
    $region22: #{tpu_custom_call.1} parent=1 // pred_check
      %p236 = pneg %p44
    $region23: #{tpu_custom_call.1} parent=1 // pred_check_branch
      %238 = sbr.rel (%p236) target = $region25
    $region24: #{tpu_custom_call.1} parent=1 // pred_region
      %v239 = vld [vmem:[#allocation2] sm:$0xff]
      %v240 = vld [vmem:[#allocation2 + $0x8] sm:$0xff]
      %v241 = vld [vmem:[#allocation2 + $0x10] sm:$0xff]
      %v242 = vld [vmem:[#allocation2 + $0x18] sm:$0xff]
      %243 = vst [vmem:[#allocation8] sm:$0xff] %v239
      %244 = vst [vmem:[#allocation8 + $0x8] sm:$0xff] %v240
      %245 = vst [vmem:[#allocation8 + $0x10] sm:$0xff] %v241
      %246 = vst [vmem:[#allocation8 + $0x18] sm:$0xff] %v242
    $region25: #{tpu_custom_call.1} parent=1 // pred_fallthru
      _
    // Predicated region
    $region26: #{tpu_custom_call.1} parent=1 // pred_check
      _
    $region27: #{tpu_custom_call.1} parent=1 // pred_check_branch
      %248 = sbr.rel (0) target = $region29
    $region28: #{tpu_custom_call.1} parent=1 // pred_region
      %250 = vsyncadd [#allocation5], 0
      %s251 = sshll.u32 [#allocation8], 4
      %s252 = int_to_ptr.vmem [resolvable:$true] %s251
      %s253 = sshll.u32 %s2, 4
      %s254 = int_to_ptr.hbm [resolvable:$true] %s253
      %259 = dma.vmem_to_hbm [thread:$0]  %s252, 512, %s254, [#allocation5], 128, 128, 8
    $region29: #{tpu_custom_call.1} parent=1 // pred_fallthru
      _
    // Predicated region
    $region30: #{tpu_custom_call.1} parent=1 // pred_check
      _
    $region31: #{tpu_custom_call.1} parent=1 // pred_check_branch
      %261 = sbr.rel (0) target = $region33
    $region32: #{tpu_custom_call.1} parent=1 // pred_region
      %263 = dma.done [#allocation5], 512
    $region33: #{tpu_custom_call.1} parent=1 // pred_fallthru
      _
    %264 = vsyncpa [#allocation4], 1
    %265 = vsyncpa [#allocation7], 1
    %266 = vsyncpa [#allocation5], 1

</llo_original>
